<compile_context>
chip_gen: v5e
topology: v5e:2x2
jax: 0.10.0
libtpu: 0.0.40
codegen_flags: <defaults>
</compile_context>

<pallas_src>
import jax
import jax.numpy as jnp
from jax.experimental import pallas as pl
from jax.experimental.pallas import tpu as pltpu

HIDDEN_DIM = 32
INPUT_DIM = 4
LANES = 128                      # = 4 * HIDDEN_DIM = full vreg lane width

# Weight-slab row offsets: every weight-block load below is a whole number of
# bf16 (16,128) sublane tiles (start & size multiples of 16).
R_WCAT = 0                       # [W_ih; W_hh], 36 real rows
GATE_K = 48                      # K-window for the fused gate matmul
R_BIAS = 48                      # 4 bias rows (gate, fc1, fc2, fc3)
R_W1 = 64                        # fc1 weight, 32 rows
R_W2 = 96                        # fc2 weight
FC2_K = 16
R_W3 = 112                       # fc3 weight
FC3_K = 16
SLAB_ROWS = 128                  # 128 x 128 bf16 = 32 KiB in VMEM


def _lstm_cell_and_head(xh, c_in, slab_ref):
    """One LSTM cell step + MLP head, all lane-dense.

    xh:   (1, LANES) f32 = [x(4) | h(32) | zeros]
    c_in: (1, LANES) f32 = [c(32) | zeros]
    Returns (y_row, h_full, c_full), each (1, LANES) f32 with the payload in
    the low lanes and exact zeros elsewhere.
    """
    H = HIDDEN_DIM
    lane = jax.lax.broadcasted_iota(jnp.int32, (1, LANES), 1)

    def wdot(lhs, r0, k):
        # bf16 x bf16 MXU matmul, f32 accumulation; zero-padded rows/lanes are
        # exact no-ops.
        return jnp.dot(lhs[:, 0:k].astype(jnp.bfloat16),
                       slab_ref[r0:r0 + k, :],
                       preferred_element_type=jnp.float32)

    # One aligned 16-row bias-block load, then cheap f32 row selects.
    b4 = slab_ref[R_BIAS:R_BIAS + 16, :].astype(jnp.float32)

    # LSTM gates: single fused [x|h] @ [W_ih; W_hh] projection, lanes [i|f|g|o].
    gates = wdot(xh, R_WCAT, GATE_K) + b4[0:1, :]
    sig = jax.nn.sigmoid(gates)              # 2 full-width EUP activations
    th = jnp.tanh(gates)
    i_g = sig                                # i gate already in lanes 0:H
    f_g = pltpu.roll(sig, LANES - H, 1)      # f gate -> lanes 0:H (XLU rotate)
    g_g = pltpu.roll(th, LANES - 2 * H, 1)   # g gate -> lanes 0:H
    o_g = pltpu.roll(sig, LANES - 3 * H, 1)  # o gate -> lanes 0:H

    c_full = jnp.where(lane < H, f_g * c_in + i_g * g_g, 0.0)
    # tanh(c_full)==0 beyond lane H, so h_full is exactly zero there already.
    h_full = o_g * jnp.tanh(c_full)

    # MLP head: relu(fc1) -> relu(fc2) -> fc3, zero lanes propagate exactly.
    y = jnp.maximum(wdot(h_full, R_W1, H) + b4[1:2, :], 0.0)
    y = jnp.maximum(wdot(y, R_W2, FC2_K) + b4[2:3, :], 0.0)
    y = wdot(y, R_W3, FC3_K) + b4[3:4, :]
    return y, h_full, c_full


def lstm_step_kernel(state_ref, slab_ref, out_ref):
    """Single-timestep kernel (matches LSTMModel.forward)."""
    lane = jax.lax.broadcasted_iota(jnp.int32, (1, LANES), 1)
    xh = state_ref[0:1, :]
    y_row, h_full, c_full = _lstm_cell_and_head(xh, state_ref[1:2, :], slab_ref)

    # Round-trip state tile: row0=[x|h_new|0], row1=[c_new|0], row2=[y|0].
    out_ref[0:1, :] = jnp.where(lane < INPUT_DIM, xh,
                                pltpu.roll(h_full, INPUT_DIM, 1))
    out_ref[1:2, :] = c_full
    out_ref[2:3, :] = y_row
    out_ref[3:8, :] = jnp.zeros((5, LANES), jnp.float32)


def lstm_seq_kernel(x_ref, state0_ref, slab_ref, y_ref, hc_ref):
    """T-step recurrent kernel: grid=(T,), state carried in the resident
    hc output block (block index constant across the grid), slab DMA'd once."""
    t = pl.program_id(0)

    @pl.when(t == 0)
    def _():
        hc_ref[...] = state0_ref[...]        # load initial (h, c) into VMEM

    lane = jax.lax.broadcasted_iota(jnp.int32, (1, LANES), 1)
    x_row = x_ref[0]                         # (1, LANES) = [x_t | zeros]
    xh = jnp.where(lane < INPUT_DIM, x_row, hc_ref[0:1, :])
    y_row, h_full, c_full = _lstm_cell_and_head(xh, hc_ref[1:2, :], slab_ref)

    hc_ref[0:1, :] = pltpu.roll(h_full, INPUT_DIM, 1)   # [0(4) | h_new | 0]
    hc_ref[1:2, :] = c_full
    y_ref[0] = y_row


def pack_weight_slab(params):
    """One-time packing of all weights/biases into a single (128,128) bf16 slab.

    NOTE: expects weights already transposed to (in, out) with PyTorch's
    [i|f|g|o] gate-column order preserved (see asserts)."""
    H = HIDDEN_DIM
    assert params["w_ih"].shape == (INPUT_DIM, 4 * H), "w_ih must be (4, 4H) = weight_ih_l0.T"
    assert params["w_hh"].shape == (H, 4 * H), "w_hh must be (H, 4H) = weight_hh_l0.T"

    slab = jnp.zeros((SLAB_ROWS, LANES), jnp.float32)
    slab = slab.at[R_WCAT:R_WCAT + INPUT_DIM, 0:4 * H].set(params["w_ih"])
    slab = slab.at[R_WCAT + INPUT_DIM:R_WCAT + INPUT_DIM + H, 0:4 * H].set(params["w_hh"])
    slab = slab.at[R_BIAS + 0, 0:4 * H].set((params["b_ih"] + params["b_hh"]).reshape(-1))
    slab = slab.at[R_BIAS + 1, 0:12].set(params["b1"].reshape(-1))
    slab = slab.at[R_BIAS + 2, 0:8].set(params["b2"].reshape(-1))
    slab = slab.at[R_BIAS + 3, 0:4].set(params["b3"].reshape(-1))
    slab = slab.at[R_W1:R_W1 + H, 0:12].set(params["w1"])
    slab = slab.at[R_W2:R_W2 + 12, 0:8].set(params["w2"])
    slab = slab.at[R_W3:R_W3 + 8, 0:4].set(params["w3"])
    return slab.astype(jnp.bfloat16)


def pack_state_tile(x, h, c):
    """(8,128) f32 round-trip state tile: row0=[x|h|0], row1=[c|0]."""
    state = jnp.zeros((8, LANES), jnp.float32)
    state = state.at[0, 0:INPUT_DIM].set(x.reshape(INPUT_DIM).astype(jnp.float32))
    state = state.at[0, INPUT_DIM:INPUT_DIM + HIDDEN_DIM].set(
        h.reshape(HIDDEN_DIM).astype(jnp.float32))
    state = state.at[1, 0:HIDDEN_DIM].set(c.reshape(HIDDEN_DIM).astype(jnp.float32))
    return state


@jax.jit
def lstm_model_forward(x, hidden, cell, slab):
    """x: (1,1,4), hidden/cell: (1,1,H).  Returns (output(1,1,4), (h, c))."""
    state = pack_state_tile(x, hidden, cell)
    vmem = pl.BlockSpec(memory_space=pltpu.MemorySpace.VMEM)
    out_tile = pl.pallas_call(
        lstm_step_kernel,
        out_shape=jax.ShapeDtypeStruct((8, LANES), jnp.float32),
        in_specs=[vmem, vmem],
        out_specs=vmem,
        cost_estimate=pl.CostEstimate(
            flops=30_000, transcendentals=512, bytes_accessed=41_000),
    )(state, slab)

    y = out_tile[2, 0:INPUT_DIM].reshape(1, 1, INPUT_DIM)
    h_new = out_tile[0, INPUT_DIM:INPUT_DIM + HIDDEN_DIM].reshape(1, 1, HIDDEN_DIM)
    c_new = out_tile[1, 0:HIDDEN_DIM].reshape(1, 1, HIDDEN_DIM)
    return y, (h_new, c_new)


@jax.jit
def lstm_model_sequence(xs, hidden, cell, slab):
    """Drive the cell over T steps inside ONE kernel (recurrence internal).

    xs: (T, 4).  Returns (ys (T,4), (h (1,1,H), c (1,1,H)))."""
    T = xs.shape[0]
    xs_rows = jnp.zeros((T, 1, LANES), jnp.float32)
    xs_rows = xs_rows.at[:, 0, 0:INPUT_DIM].set(xs.astype(jnp.float32))
    state0 = pack_state_tile(jnp.zeros((INPUT_DIM,), jnp.float32), hidden, cell)

    ys, hc = pl.pallas_call(
        lstm_seq_kernel,
        out_shape=(jax.ShapeDtypeStruct((T, 1, LANES), jnp.float32),
                   jax.ShapeDtypeStruct((8, LANES), jnp.float32)),
        grid=(T,),
        in_specs=[pl.BlockSpec((1, 1, LANES), lambda t: (t, 0, 0)),
                  pl.BlockSpec((8, LANES), lambda t: (0, 0)),
                  pl.BlockSpec((SLAB_ROWS, LANES), lambda t: (0, 0))],
        out_specs=(pl.BlockSpec((1, 1, LANES), lambda t: (t, 0, 0)),
                   pl.BlockSpec((8, LANES), lambda t: (0, 0))),
        compiler_params=pltpu.CompilerParams(
            dimension_semantics=("arbitrary",)),
    )(xs_rows, state0, slab)

    y_seq = ys[:, 0, 0:INPUT_DIM]
    h_new = hc[0, INPUT_DIM:INPUT_DIM + HIDDEN_DIM].reshape(1, 1, HIDDEN_DIM)
    c_new = hc[1, 0:HIDDEN_DIM].reshape(1, 1, HIDDEN_DIM)
    return y_seq, (h_new, c_new)


def init_params(key, hidden_dim):
    """Deterministic synthetic init; same shapes as the torch module (weights pre-transposed)."""
    ks = jax.random.split(key, 10)
    k = 1.0 / jnp.sqrt(hidden_dim)

    def u(key, shape, scale):
        return jax.random.uniform(key, shape, jnp.float32, -scale, scale)

    return {
        # torch weight_ih_l0: (4H, 4) -> stored transposed (4, 4H), gate order [i|f|g|o]
        "w_ih": u(ks[0], (INPUT_DIM, 4 * hidden_dim), k),
        "w_hh": u(ks[1], (hidden_dim, 4 * hidden_dim), k),
        "b_ih": u(ks[2], (1, 4 * hidden_dim), k),
        "b_hh": u(ks[3], (1, 4 * hidden_dim), k),
        # fc layers stored as (in, out)
        "w1": u(ks[4], (hidden_dim, 12), 1.0 / jnp.sqrt(hidden_dim)),
        "b1": u(ks[5], (1, 12), 1.0 / jnp.sqrt(hidden_dim)),
        "w2": u(ks[6], (12, 8), 1.0 / jnp.sqrt(12.0)),
        "b2": u(ks[7], (1, 8), 1.0 / jnp.sqrt(12.0)),
        "w3": u(ks[8], (8, 4), 1.0 / jnp.sqrt(8.0)),
        "b3": u(ks[9], (1, 4), 1.0 / jnp.sqrt(8.0)),
    }


def reference_forward(x, hidden, cell, params):
    """Plain-JAX f32 reference (unfused) for validation."""
    H = hidden.shape[-1]
    x2 = x.reshape(1, INPUT_DIM)
    h = hidden.reshape(1, H)
    c = cell.reshape(1, H)
    gates = x2 @ params["w_ih"] + h @ params["w_hh"] + params["b_ih"] + params["b_hh"]
    i_g = jax.nn.sigmoid(gates[:, 0 * H:1 * H])
    f_g = jax.nn.sigmoid(gates[:, 1 * H:2 * H])
    g_g = jnp.tanh(gates[:, 2 * H:3 * H])
    o_g = jax.nn.sigmoid(gates[:, 3 * H:4 * H])
    c_new = f_g * c + i_g * g_g
    h_new = o_g * jnp.tanh(c_new)
    y = jax.nn.relu(h_new @ params["w1"] + params["b1"])
    y = jax.nn.relu(y @ params["w2"] + params["b2"])
    y = y @ params["w3"] + params["b3"]
    return y.reshape(1, 1, 4), (h_new.reshape(1, 1, H), c_new.reshape(1, 1, H))


if __name__ == "__main__":
    key = jax.random.PRNGKey(0)
    k_par, k_x, k_h, k_c, k_seq = jax.random.split(key, 5)

    params = init_params(k_par, HIDDEN_DIM)
    slab = pack_weight_slab(params)          # one-time bf16 weight packing

    x = jax.random.normal(k_x, (1, 1, INPUT_DIM), jnp.float32)   # input.view(1,1,-1)
    hidden = jax.random.normal(k_h, (1, 1, HIDDEN_DIM), jnp.float32)
    cell = jax.random.normal(k_c, (1, 1, HIDDEN_DIM), jnp.float32)

    # --- single step (exact torch forward semantics) -------------------------
    out, (h_new, c_new) = lstm_model_forward(x, hidden, cell, slab)
    jax.block_until_ready((out, h_new, c_new))
    ref_out, (ref_h, ref_c) = reference_forward(x, hidden, cell, params)
    # bf16 weight storage -> relaxed tolerance vs f32 reference.
    assert jnp.allclose(out, ref_out, atol=2e-2), "output mismatch"
    assert jnp.allclose(h_new, ref_h, atol=2e-2), "hidden mismatch"
    assert jnp.allclose(c_new, ref_c, atol=2e-2), "cell mismatch"

    # --- T-step recurrence inside a single kernel (launch/DMA amortized) -----
    T = 8
    xs = jax.random.normal(k_seq, (T, INPUT_DIM), jnp.float32)
    ys, (h_T, c_T) = lstm_model_sequence(xs, hidden, cell, slab)
    jax.block_until_ready((ys, h_T, c_T))

    ref_h_t, ref_c_t = hidden, cell
    ref_ys = []
    for t in range(T):
        y_t, (ref_h_t, ref_c_t) = reference_forward(
            xs[t].reshape(1, 1, INPUT_DIM), ref_h_t, ref_c_t, params)
        ref_ys.append(y_t.reshape(INPUT_DIM))
    ref_ys = jnp.stack(ref_ys)
    assert jnp.allclose(ys, ref_ys, atol=3e-2), "sequence output mismatch"
    assert jnp.allclose(h_T, ref_h_t, atol=3e-2), "sequence hidden mismatch"
    assert jnp.allclose(c_T, ref_c_t, atol=3e-2), "sequence cell mismatch"

    print("KERNEL_OK")
</pallas_src>

<mosaic_0001>
module attributes {stable_mosaic.version = 11 : i64} {
  func.func @lstm_step_kernel(%arg0: memref<8x128xf32, #tpu.memory_space<vmem>>, %arg1: memref<128x128xbf16, #tpu.memory_space<vmem>>, %arg2: memref<8x128xf32, #tpu.memory_space<vmem>>) attributes {dimension_semantics = [], scalar_prefetch = 0 : i64, scratch_operands = 0 : i64, tpu.core_type = #tpu.core_type<tc>} {
    %0 = tpu.iota {dimensions = array<i32: 1>} : vector<1x128xi32>
    %c0 = arith.constant 0 : index
    %c0_0 = arith.constant 0 : index
    %1 = vector.load %arg0[%c0, %c0_0] : memref<8x128xf32, #tpu.memory_space<vmem>>, vector<1x128xf32>
    %c1 = arith.constant 1 : index
    %c0_1 = arith.constant 0 : index
    %2 = vector.load %arg0[%c1, %c0_1] : memref<8x128xf32, #tpu.memory_space<vmem>>, vector<1x128xf32>
    %3 = tpu.iota {dimensions = array<i32: 1>} : vector<1x128xi32>
    %c48 = arith.constant 48 : index
    %c0_2 = arith.constant 0 : index
    %4 = vector.load %arg1[%c48, %c0_2] : memref<128x128xbf16, #tpu.memory_space<vmem>>, vector<16x128xbf16>
    %5 = arith.extf %4 : vector<16x128xbf16> to vector<16x128xf32>
    %6 = vector.extract_strided_slice %1 {offsets = [0, 0], sizes = [1, 48], strides = [1, 1]} : vector<1x128xf32> to vector<1x48xf32>
    %7 = arith.truncf %6 : vector<1x48xf32> to vector<1x48xbf16>
    %c0_3 = arith.constant 0 : index
    %c0_4 = arith.constant 0 : index
    %8 = vector.load %arg1[%c0_3, %c0_4] : memref<128x128xbf16, #tpu.memory_space<vmem>>, vector<48x128xbf16>
    %cst = arith.constant dense<0.000000e+00> : vector<1x128xf32>
    %9 = tpu.matmul %7, %8, %cst {dimension_numbers = #tpu.dot_dimension_numbers<[1], [0], [0], [1], [0, 0, 1, 1], [], []>} : vector<1x48xbf16>, vector<48x128xbf16>, vector<1x128xf32> -> vector<1x128xf32>
    %10 = vector.extract_strided_slice %5 {offsets = [0, 0], sizes = [1, 128], strides = [1, 1]} : vector<16x128xf32> to vector<1x128xf32>
    %11 = arith.addf %9, %10 : vector<1x128xf32>
    %12 = arith.negf %11 : vector<1x128xf32>
    %13 = math.exp %12 : vector<1x128xf32>
    %cst_5 = arith.constant 1.000000e+00 : f32
    %14 = vector.broadcast %cst_5 : f32 to vector<1x128xf32>
    %15 = arith.addf %14, %13 : vector<1x128xf32>
    %16 = arith.divf %14, %15 : vector<1x128xf32>
    %17 = math.tanh %11 : vector<1x128xf32>
    %c96_i32 = arith.constant 96 : i32
    %18 = tpu.dynamic_rotate %16 by %c96_i32 dim 1 : vector<1x128xf32>, i32 -> vector<1x128xf32>
    %c64_i32 = arith.constant 64 : i32
    %19 = tpu.dynamic_rotate %17 by %c64_i32 dim 1 : vector<1x128xf32>, i32 -> vector<1x128xf32>
    %c32_i32 = arith.constant 32 : i32
    %20 = tpu.dynamic_rotate %16 by %c32_i32 dim 1 : vector<1x128xf32>, i32 -> vector<1x128xf32>
    %c32_i32_6 = arith.constant 32 : i32
    %21 = vector.broadcast %c32_i32_6 : i32 to vector<1x128xi32>
    %22 = arith.cmpi slt, %3, %21 : vector<1x128xi32>
    %23 = arith.mulf %18, %2 : vector<1x128xf32>
    %24 = arith.mulf %16, %19 : vector<1x128xf32>
    %25 = arith.addf %23, %24 : vector<1x128xf32>
    %cst_7 = arith.constant 0.000000e+00 : f32
    %26 = vector.broadcast %cst_7 : f32 to vector<1x128xf32>
    %27 = arith.select %22, %25, %26 : vector<1x128xi1>, vector<1x128xf32>
    %28 = math.tanh %27 : vector<1x128xf32>
    %29 = arith.mulf %20, %28 : vector<1x128xf32>
    %30 = vector.extract_strided_slice %29 {offsets = [0, 0], sizes = [1, 32], strides = [1, 1]} : vector<1x128xf32> to vector<1x32xf32>
    %31 = arith.truncf %30 : vector<1x32xf32> to vector<1x32xbf16>
    %c64 = arith.constant 64 : index
    %c0_8 = arith.constant 0 : index
    %32 = vector.load %arg1[%c64, %c0_8] : memref<128x128xbf16, #tpu.memory_space<vmem>>, vector<32x128xbf16>
    %cst_9 = arith.constant dense<0.000000e+00> : vector<1x128xf32>
    %33 = tpu.matmul %31, %32, %cst_9 {dimension_numbers = #tpu.dot_dimension_numbers<[1], [0], [0], [1], [0, 0, 1, 1], [], []>} : vector<1x32xbf16>, vector<32x128xbf16>, vector<1x128xf32> -> vector<1x128xf32>
    %34 = vector.extract_strided_slice %5 {offsets = [1, 0], sizes = [1, 128], strides = [1, 1]} : vector<16x128xf32> to vector<1x128xf32>
    %35 = arith.addf %33, %34 : vector<1x128xf32>
    %cst_10 = arith.constant 0.000000e+00 : f32
    %36 = vector.broadcast %cst_10 : f32 to vector<1x128xf32>
    %37 = arith.maximumf %35, %36 : vector<1x128xf32>
    %38 = vector.extract_strided_slice %37 {offsets = [0, 0], sizes = [1, 16], strides = [1, 1]} : vector<1x128xf32> to vector<1x16xf32>
    %39 = arith.truncf %38 : vector<1x16xf32> to vector<1x16xbf16>
    %c96 = arith.constant 96 : index
    %c0_11 = arith.constant 0 : index
    %40 = vector.load %arg1[%c96, %c0_11] : memref<128x128xbf16, #tpu.memory_space<vmem>>, vector<16x128xbf16>
    %cst_12 = arith.constant dense<0.000000e+00> : vector<1x128xf32>
    %41 = tpu.matmul %39, %40, %cst_12 {dimension_numbers = #tpu.dot_dimension_numbers<[1], [0], [0], [1], [0, 0, 1, 1], [], []>} : vector<1x16xbf16>, vector<16x128xbf16>, vector<1x128xf32> -> vector<1x128xf32>
    %42 = vector.extract_strided_slice %5 {offsets = [2, 0], sizes = [1, 128], strides = [1, 1]} : vector<16x128xf32> to vector<1x128xf32>
    %43 = arith.addf %41, %42 : vector<1x128xf32>
    %cst_13 = arith.constant 0.000000e+00 : f32
    %44 = vector.broadcast %cst_13 : f32 to vector<1x128xf32>
    %45 = arith.maximumf %43, %44 : vector<1x128xf32>
    %46 = vector.extract_strided_slice %45 {offsets = [0, 0], sizes = [1, 16], strides = [1, 1]} : vector<1x128xf32> to vector<1x16xf32>
    %47 = arith.truncf %46 : vector<1x16xf32> to vector<1x16xbf16>
    %c112 = arith.constant 112 : index
    %c0_14 = arith.constant 0 : index
    %48 = vector.load %arg1[%c112, %c0_14] : memref<128x128xbf16, #tpu.memory_space<vmem>>, vector<16x128xbf16>
    %cst_15 = arith.constant dense<0.000000e+00> : vector<1x128xf32>
    %49 = tpu.matmul %47, %48, %cst_15 {dimension_numbers = #tpu.dot_dimension_numbers<[1], [0], [0], [1], [0, 0, 1, 1], [], []>} : vector<1x16xbf16>, vector<16x128xbf16>, vector<1x128xf32> -> vector<1x128xf32>
    %50 = vector.extract_strided_slice %5 {offsets = [3, 0], sizes = [1, 128], strides = [1, 1]} : vector<16x128xf32> to vector<1x128xf32>
    %51 = arith.addf %49, %50 : vector<1x128xf32>
    %c4_i32 = arith.constant 4 : i32
    %52 = vector.broadcast %c4_i32 : i32 to vector<1x128xi32>
    %53 = arith.cmpi slt, %0, %52 : vector<1x128xi32>
    %c4_i32_16 = arith.constant 4 : i32
    %54 = tpu.dynamic_rotate %29 by %c4_i32_16 dim 1 : vector<1x128xf32>, i32 -> vector<1x128xf32>
    %55 = arith.select %53, %1, %54 : vector<1x128xi1>, vector<1x128xf32>
    %c0_17 = arith.constant 0 : index
    %c0_18 = arith.constant 0 : index
    %56 = vector.load %arg2[%c0_17, %c0_18] : memref<8x128xf32, #tpu.memory_space<vmem>>, vector<1x128xf32>
    tpu.vector_store %arg2[%c0_17, %c0_18], %55 {strides = array<i32>} : memref<8x128xf32, #tpu.memory_space<vmem>>, vector<1x128xf32>,
    %c1_19 = arith.constant 1 : index
    %c0_20 = arith.constant 0 : index
    %57 = vector.load %arg2[%c1_19, %c0_20] : memref<8x128xf32, #tpu.memory_space<vmem>>, vector<1x128xf32>
    tpu.vector_store %arg2[%c1_19, %c0_20], %27 {strides = array<i32>} : memref<8x128xf32, #tpu.memory_space<vmem>>, vector<1x128xf32>,
    %c2 = arith.constant 2 : index
    %c0_21 = arith.constant 0 : index
    %58 = vector.load %arg2[%c2, %c0_21] : memref<8x128xf32, #tpu.memory_space<vmem>>, vector<1x128xf32>
    tpu.vector_store %arg2[%c2, %c0_21], %51 {strides = array<i32>} : memref<8x128xf32, #tpu.memory_space<vmem>>, vector<1x128xf32>,
    %cst_22 = arith.constant 0.000000e+00 : f32
    %59 = vector.broadcast %cst_22 : f32 to vector<5x128xf32>
    %c3 = arith.constant 3 : index
    %c0_23 = arith.constant 0 : index
    %60 = vector.load %arg2[%c3, %c0_23] : memref<8x128xf32, #tpu.memory_space<vmem>>, vector<5x128xf32>
    tpu.vector_store %arg2[%c3, %c0_23], %59 {strides = array<i32>} : memref<8x128xf32, #tpu.memory_space<vmem>>, vector<5x128xf32>,
    return
  }
}

</mosaic_0001>

<llo_original>
// kernel: lstm_model_forward.1
$region0: #{lstm_model_forward.1}
  #allocation0 [shape = 'u32[]', space=smem, size = 0x4, offset = 0x4, fixed_abs, tag = 'smem constant byte address 0x4 - core index']
  #allocation1 [shape = 'u32[72,128]{1,0:T(1,128)}', space=vmem, size = 0x9000, scoped, tag = 'internal scratch']
  %s0 = inlined_call_operand.vmem [shape: f32[8,128], index: 0, kind: input, shape index: {}]
  %s1 = inlined_call_operand.hbm [shape: bf16[128,128], index: 1, kind: input, shape index: {}]
  %s2 = inlined_call_operand.vmem [shape: f32[8,128], index: 2, kind: output, shape index: {}]
  %s3 = sld [smem:[#allocation0]]
  $region22: #{lstm_model_forward.1} parent=0
    _
  %s5 = ssub.s32 1, %s3
  %s6 = scalar_select 0, %s5, %s3
  $region1: #{lstm_model_forward.1} parent=0
    #allocation2 [shape = 'u8[32768]{0}', space=vmem, size = 0x8000, scoped, tag = 'input window, operand 1, single buffered']
    #allocation3 [shape = 's32[1]{0}', space=sflag, size = 0x4, scoped, tag = 'scoped memory for lstm_model_forward.1']
    %7 = vsyncpa [#allocation3], 0
    // Predicated region
    $region2: #{lstm_model_forward.1} parent=1 // pred_check
      _
    $region3: #{lstm_model_forward.1} parent=1 // pred_check_branch
      %9 = sbr.rel (0) target = $region5
    $region4: #{lstm_model_forward.1} parent=1 // pred_region
      _
    $region5: #{lstm_model_forward.1} parent=1 // pred_fallthru
      _
    // Predicated region
    $region6: #{lstm_model_forward.1} parent=1 // pred_check
      _
    $region7: #{lstm_model_forward.1} parent=1 // pred_check_branch
      %11 = sbr.rel (0) target = $region9
    $region8: #{lstm_model_forward.1} parent=1 // pred_region
      %13 = vsyncadd [#allocation3], 0
      %s14 = sshll.u32 %s1, 4
      %s15 = int_to_ptr.hbm [resolvable:$true] %s14
      %s16 = sshll.u32 [#allocation2], 4
      %s17 = int_to_ptr.vmem [resolvable:$true] %s16
      %22 = dma.hbm_to_vmem [thread:$0]  %s15, 1024, %s17, [#allocation3], 64, 64, 4
    $region9: #{lstm_model_forward.1} parent=1 // pred_fallthru
      _
    // Predicated region
    $region10: #{lstm_model_forward.1} parent=1 // pred_check
      _
    $region11: #{lstm_model_forward.1} parent=1 // pred_check_branch
      %24 = sbr.rel (0) target = $region13
    $region12: #{lstm_model_forward.1} parent=1 // pred_region
      %26 = dma.done [#allocation3], 1024
    $region13: #{lstm_model_forward.1} parent=1 // pred_fallthru
      _
    %v28 = vlaneseq
    %v29 = vand.u32 %v28, 127
    %v30 = vld [vmem:[%s0] sm:$0x1]
    %v31 = vld [vmem:[%s0 + $0x1] sm:$0x1]
    %v32 = vld [vmem:[#allocation2 + $0x18] sm:$0xf]
    %v33 = vunpack.c.l.bf16 %v32
    %v34 = vpack.c.bf16 %v30, %v30
    %v35 = vld [vmem:[#allocation2] sm:$0xf]
    %v36 = vld [vmem:[#allocation2 + $0x4] sm:$0xf]
    %v37 = vld [vmem:[#allocation2 + $0x8] sm:$0xf]
    %v38 = vld [vmem:[#allocation2 + $0xc] sm:$0xf]
    %v39 = vld [vmem:[#allocation2 + $0x10] sm:$0xf]
    %v40 = vld [vmem:[#allocation2 + $0x14] sm:$0xf]
    %v47 = vunpack.c.l.b16 %v35
    %v48 = vunpack.c.l.b16 %v36
    %v49 = vunpack.c.l.b16 %v37
    %v50 = vunpack.c.l.b16 %v38
    %v51 = vunpack.c.l.b16 %v39
    %v52 = vunpack.c.l.b16 %v40
    %v53 = vpack.c.b16 %v48, %v47
    %v54 = vpack.c.b16 %v50, %v49
    %v55 = vpack.c.b16 %v52, %v51
    %vm59 = vcmask 392192
    %v61 = vsel %vm59, %v34, 0
    %63 = vmatpush.bf16.msra.mxu0 0
    %64 = vmatpush.bf16.msra.mxu0 0
    %65 = vmatpush.bf16.msra.mxu0 0
    %66 = vmatpush.bf16.msra.mxu0 0
    %67 = vmatpush.bf16.msra.mxu0 0
    %68 = vmatpush.bf16.msra.mxu0 %v55
    %69 = vmatpush.bf16.msra.mxu0 %v54
    %70 = vmatpush.bf16.msra.mxu0 %v53
    %71 = vmatmul.bf16.gmra.mxu0 %v61
    %v72 = vpop.f32.mrf.mxu0
    %v73 = vadd.f32 %v33, %v72
    %v74 = vpop.f32.mrf.mxu0
    %75 = vdwg.mxu0
    %v76 = vxor.u32 %v73, 2147483648
    %v77 = vmul.f32 %v76, 1.442695
    %v78 = vpow.pop %v77
    %v79 = vadd.f32 %v78, 1.0
    %v80 = vrcp.pop %v79
    %v81 = vmul.f32 %v79, %v80
    %v82 = vsub.f32 1.0, %v81
    %v83 = vmul.f32 %v80, %v82
    %v84 = vadd.f32 %v80, %v83
    %vm85 = vweird.f32 %v79
    %vm86 = vweird.f32 %v80
    %vm87 = vmor %vm85, %vm86
    %v88 = vsel %vm87, %v80, %v84
    %v89 = vand.u32 2147483647, %v79
    %vm90 = vcmp.eq.f32.partialorder %v89, 8.507059e+37
    %v91 = vand.u32 %v79, 2147483648
    %v92 = vor.u32 1.1754944e-38, %v91
    %v93 = vsel %vm90, %v92, %v88
    %v94 = vmul.f32 1.0, %v93
    %v95 = vtanh.pop %v73
    %96 = vrot.lane.b32.xlu0 %v94, 96
    %v97 = vpop.permute.xlu0 %96
    %98 = vrot.lane.b32.xlu0 %v95, 64
    %v99 = vpop.permute.xlu0 %98
    %100 = vrot.lane.b32.xlu0 %v94, 32
    %v101 = vpop.permute.xlu0 %100
    %vm102 = vcmp.lt.s32.totalorder %v29, 32
    %v103 = vmul.f32 %v97, %v31
    %v104 = vmul.f32 %v94, %v99
    %v105 = vadd.f32 %v103, %v104
    %v106 = vsel %vm102, %v105, 0.0
    %v107 = vtanh.pop %v106
    %v108 = vmul.f32 %v101, %v107
    %v109 = vpack.c.bf16 %v108, %v108
    %v110 = vld [vmem:[#allocation2 + $0x20] sm:$0xf]
    %v111 = vld [vmem:[#allocation2 + $0x24] sm:$0xf]
    %v112 = vld [vmem:[#allocation2 + $0x28] sm:$0xf]
    %v113 = vld [vmem:[#allocation2 + $0x2c] sm:$0xf]
    %v118 = vunpack.c.l.b16 %v110
    %v119 = vunpack.c.l.b16 %v111
    %v120 = vunpack.c.l.b16 %v112
    %v121 = vunpack.c.l.b16 %v113
    %v122 = vpack.c.b16 %v119, %v118
    %v123 = vpack.c.b16 %v121, %v120
    %v127 = vrot.slane %v33, 1
    %vm129 = vcmask 261120
    %v131 = vsel %vm129, %v109, 0
    %133 = vmatpush.bf16.msra.mxu0 0
    %134 = vmatpush.bf16.msra.mxu0 0
    %135 = vmatpush.bf16.msra.mxu0 0
    %136 = vmatpush.bf16.msra.mxu0 0
    %137 = vmatpush.bf16.msra.mxu0 0
    %138 = vmatpush.bf16.msra.mxu0 0
    %139 = vmatpush.bf16.msra.mxu0 %v123
    %140 = vmatpush.bf16.msra.mxu0 %v122
    %141 = vmatmul.bf16.gmra.mxu0 %v131
    %v142 = vpop.f32.mrf.mxu0
    %v143 = vadd.f32 %v127, %v142
    %v144 = vpop.f32.mrf.mxu0
    %145 = vdwg.mxu0
    %v146 = vmax.f32 %v143, 0.0
    %v147 = vpack.c.bf16 %v146, %v146
    %v148 = vld [vmem:[#allocation2 + $0x30] sm:$0xf]
    %v149 = vld [vmem:[#allocation2 + $0x34] sm:$0xf]
    %v152 = vunpack.c.l.b16 %v148
    %v153 = vunpack.c.l.b16 %v149
    %v154 = vpack.c.b16 %v153, %v152
    %v156 = vrot.slane %v33, 2
    %vm158 = vcmask 130048
    %v160 = vsel %vm158, %v147, 0
    %162 = vmatpush.bf16.msra.mxu0 0
    %163 = vmatpush.bf16.msra.mxu0 0
    %164 = vmatpush.bf16.msra.mxu0 0
    %165 = vmatpush.bf16.msra.mxu0 0
    %166 = vmatpush.bf16.msra.mxu0 0
    %167 = vmatpush.bf16.msra.mxu0 0
    %168 = vmatpush.bf16.msra.mxu0 0
    %169 = vmatpush.bf16.msra.mxu0 %v154
    %170 = vmatmul.bf16.gmra.mxu0 %v160
    %v171 = vpop.f32.mrf.mxu0
    %v172 = vadd.f32 %v156, %v171
    %v173 = vpop.f32.mrf.mxu0
    %174 = vdwg.mxu0
    %v175 = vmax.f32 %v172, 0.0
    %v176 = vpack.c.bf16 %v175, %v175
    %v177 = vld [vmem:[#allocation2 + $0x38] sm:$0xf]
    %v178 = vld [vmem:[#allocation2 + $0x3c] sm:$0xf]
    %v181 = vunpack.c.l.b16 %v177
    %v182 = vunpack.c.l.b16 %v178
    %v183 = vpack.c.b16 %v182, %v181
    %v185 = vrot.slane %v33, 3
    %v188 = vsel %vm158, %v176, 0
    %190 = vmatpush.bf16.msra.mxu0 0
    %191 = vmatpush.bf16.msra.mxu0 0
    %192 = vmatpush.bf16.msra.mxu0 0
    %193 = vmatpush.bf16.msra.mxu0 0
    %194 = vmatpush.bf16.msra.mxu0 0
    %195 = vmatpush.bf16.msra.mxu0 0
    %196 = vmatpush.bf16.msra.mxu0 0
    %197 = vmatpush.bf16.msra.mxu0 %v183
    %198 = vmatmul.bf16.gmra.mxu0 %v188
    %v199 = vpop.f32.mrf.mxu0
    %v200 = vadd.f32 %v185, %v199
    %v201 = vpop.f32.mrf.mxu0
    %202 = vdwg.mxu0
    %vm203 = vcmp.lt.s32.totalorder %v29, 4
    %204 = vrot.lane.b32.xlu0 %v108, 4
    %v205 = vpop.permute.xlu0 %204
    %v206 = vsel %vm203, %v30, %v205
    %207 = vst [vmem:[%s2] sm:$0x1] %v206
    %208 = vst [vmem:[%s2 + $0x1] sm:$0x1] %v106
    %209 = vst [vmem:[%s2 + $0x2] sm:$0x1] %v200
    %210 = vst [vmem:[%s2 + $0x3] sm:$0x1f] 0.0
    // Predicated region
    $region14: #{lstm_model_forward.1} parent=1 // pred_check
      _
    $region15: #{lstm_model_forward.1} parent=1 // pred_check_branch
      %212 = sbr.rel (0) target = $region17
    $region16: #{lstm_model_forward.1} parent=1 // pred_region
      _
    $region17: #{lstm_model_forward.1} parent=1 // pred_fallthru
      _
    // Predicated region
    $region18: #{lstm_model_forward.1} parent=1 // pred_check
      _
    $region19: #{lstm_model_forward.1} parent=1 // pred_check_branch
      %214 = sbr.rel (0) target = $region21
    $region20: #{lstm_model_forward.1} parent=1 // pred_region
      _
    $region21: #{lstm_model_forward.1} parent=1 // pred_fallthru
      _
    %215 = vsyncpa [#allocation3], 1

</llo_original>
